<compile_context>
chip_gen: v7x
topology: tpu7x:2x2x1
jax: 0.10.0
libtpu: 0.0.40
codegen_flags: <defaults>
</compile_context>

<pallas_src>
import numpy as np
import jax
import jax.numpy as jnp
from jax import lax
from jax.experimental import pallas as pl
from jax.experimental.pallas import tpu as pltpu

LANE = 128
SUBLANE = 8
_MAX_NT = 32768          # columns per grid step (>= 1 MiB / input for f32)
_STATIC_UNROLL_MAX = 8   # fully unroll in Python up to this many 128-chunks


def _round_up(v, m):
    return ((v + m - 1) // m) * m


def _divisors(n):
    ds, i = set(), 1
    while i * i <= n:
        if n % i == 0:
            ds.add(i)
            ds.add(n // i)
        i += 1
    return sorted(ds)


def _choose_fold(batch, n, bt):
    """Pick R | N for the exact (no-copy) reshape [B, N] -> [B*R, N/R].

    Prefer: rows = B*R a multiple of the sublane tile, ~2 row blocks (so the
    'parallel' grid axis feeds both v7x TensorCores), wider rows on ties.
    """
    target_rows = 2 * bt
    best_key, best_r = None, 1
    for r in _divisors(n):
        wc = n // r
        if wc < LANE and r != 1:
            continue
        rows = batch * r
        key = (rows % bt == 0, -abs(rows - target_rows), wc)
        if best_key is None or key > best_key:
            best_key, best_r = key, r
    return best_r


def _make_kernel(wc, nt, need_mask):
    """Kernel over one (bt, nt) tile; accumulates lane-wise partial sums into a
    resident (4, bt, 128) output block:
      [0] BCE-with-logits element sums   [1] sum sigmoid(x)*t
      [2] sum sigmoid(x)                 [3] sum t
    """
    n_chunks = nt // LANE

    def kernel(x_ref, t_ref, out_ref):
        n = pl.program_id(1)

        @pl.when(n == 0)
        def _init():
            out_ref[...] = jnp.zeros(out_ref.shape, out_ref.dtype)

        bt = x_ref.shape[0]
        col_base = n * nt          # first global column of this block

        def add_chunk(x_raw, t_raw, gcol0, carry):
            bce, inter, s_in, s_tg = carry
            x = x_raw.astype(jnp.float32)
            t = t_raw.astype(jnp.float32)
            e = jnp.exp(-jnp.abs(x))                  # EUP: exp
            d = 1.0 + e                               # shared by recip and log
            r = pl.reciprocal(d, approx=True)         # EUP: cheap vrcp
            r = r * (2.0 - d * r)                     # Newton step on the VPU
            sig = jnp.where(x >= 0.0, r, e * r)       # stable sigmoid
            # log(d) == log1p(e) to ~ulp for e in (0,1]; d is already live.
            b = jnp.maximum(x, 0.0) - x * t + jnp.log(d)
            if need_mask:
                gcol = gcol0 + lax.broadcasted_iota(jnp.int32, (bt, LANE), 1)
                ok = gcol < wc
                b = jnp.where(ok, b, 0.0)
                sig = jnp.where(ok, sig, 0.0)
                t = jnp.where(ok, t, 0.0)
            return (bce + b, inter + sig * t, s_in + sig, s_tg + t)

        init = tuple(jnp.zeros((bt, LANE), jnp.float32) for _ in range(4))

        if n_chunks <= _STATIC_UNROLL_MAX:
            carry = init
            for j in range(n_chunks):
                sl = slice(j * LANE, (j + 1) * LANE)
                carry = add_chunk(x_ref[:, sl], t_ref[:, sl],
                                  col_base + j * LANE, carry)
        else:
            def body(j, carry):
                c0 = pl.multiple_of(j * LANE, LANE)
                return add_chunk(x_ref[:, pl.ds(c0, LANE)],
                                 t_ref[:, pl.ds(c0, LANE)],
                                 col_base + c0, carry)
            carry = lax.fori_loop(0, n_chunks, body, init, unroll=8)

        bce, inter, s_in, s_tg = carry
        out_ref[0, :, :] = out_ref[0, :, :] + bce
        out_ref[1, :, :] = out_ref[1, :, :] + inter
        out_ref[2, :, :] = out_ref[2, :, :] + s_in
        out_ref[3, :, :] = out_ref[3, :, :] + s_tg

    return kernel


def bce_dice_loss(logits, target, smooth=1e-5):
    """logits, target: [B, ...] (e.g. NCHW). Returns scalar 0.5*BCE + dice loss."""
    x, t = logits, target
    if x.dtype not in (jnp.float32, jnp.bfloat16, jnp.float16):
        x = x.astype(jnp.float32)
    if t.dtype != x.dtype:
        t = t.astype(x.dtype)

    batch = x.shape[0]
    n = int(np.prod(x.shape[1:]))

    # sublane tile of the input dtype (8 for 4-byte floats, 16 for 2-byte)
    bt = SUBLANE * max(1, 4 // jnp.dtype(x.dtype).itemsize)

    # Fold each batch row of N elements into R sub-rows (exact reshape, no
    # HBM copy); sub-rows of one batch element stay contiguous.
    r_fold = _choose_fold(batch, n, bt)
    rows = batch * r_fold
    wc = n // r_fold

    x = x.reshape(rows, wc)
    t = t.reshape(rows, wc)

    nt = min(_MAX_NT, _round_up(wc, LANE))
    grid_b = pl.cdiv(rows, bt)
    grid_n = pl.cdiv(wc, nt)
    need_mask = (grid_n * nt != wc)     # ragged column tail masked in-kernel

    partials = pl.pallas_call(
        _make_kernel(wc, nt, need_mask),
        out_shape=jax.ShapeDtypeStruct((4, grid_b * bt, LANE), jnp.float32),
        grid=(grid_b, grid_n),
        in_specs=[
            pl.BlockSpec((bt, nt), lambda b, c: (b, c)),   # logits
            pl.BlockSpec((bt, nt), lambda b, c: (b, c)),   # target
        ],
        out_specs=pl.BlockSpec((4, bt, LANE), lambda b, c: (0, b, 0)),
        compiler_params=pltpu.CompilerParams(
            dimension_semantics=("parallel", "arbitrary")),
    )(x, t)

    # ---- tiny final reduction + loss assembly in the wrapper.
    parts = partials[:, :rows, :].reshape(4, batch, r_fold * LANE)
    parts = jnp.sum(parts, axis=-1)                        # (4, batch)
    bce = jnp.sum(parts[0]) / (batch * n)
    inter, s_in, s_tg = parts[1], parts[2], parts[3]
    dice = (2.0 * inter + smooth) / (s_in + s_tg + smooth)
    dice_loss = 1.0 - jnp.sum(dice) / batch
    return 0.5 * bce + dice_loss


if __name__ == "__main__":
    B, C, H, W = 2, 4, 16, 16
    key = jax.random.PRNGKey(0)
    kx, kt = jax.random.split(key)
    logits = jax.random.normal(kx, (B, C, H, W), jnp.float32)
    target = (jax.random.uniform(kt, (B, C, H, W)) > 0.5).astype(jnp.float32)

    loss = jax.block_until_ready(bce_dice_loss(logits, target))

    # ---- pure-JAX reference (mirrors the PyTorch module exactly)
    xr = logits.astype(jnp.float32)
    tr = target.astype(jnp.float32)
    bce_ref = jnp.mean(jnp.maximum(xr, 0.0) - xr * tr
                       + jnp.log1p(jnp.exp(-jnp.abs(xr))))
    p = jax.nn.sigmoid(xr).reshape(B, -1)
    tt = tr.reshape(B, -1)
    smooth = 1e-5
    inter = jnp.sum(p * tt, axis=1)
    dice = (2.0 * inter + smooth) / (jnp.sum(p, axis=1) + jnp.sum(tt, axis=1) + smooth)
    ref = 0.5 * bce_ref + (1.0 - jnp.sum(dice) / B)

    assert np.allclose(np.asarray(loss), np.asarray(ref), rtol=1e-3, atol=1e-5), (loss, ref)
    print("KERNEL_OK")
</pallas_src>

<mosaic_0001>
module attributes {stable_mosaic.version = 11 : i64} {
  func.func @kernel(%arg0: i32, %arg1: i32, %arg2: memref<8x128xf32, #tpu.memory_space<vmem>>, %arg3: memref<8x128xf32, #tpu.memory_space<vmem>>, %arg4: memref<4x8x128xf32, #tpu.memory_space<vmem>>) attributes {dimension_semantics = [#tpu.dimension_semantics<parallel>, #tpu.dimension_semantics<arbitrary>], iteration_bounds = array<i64: 2, 1>, scalar_prefetch = 0 : i64, scratch_operands = 0 : i64, tpu.core_type = #tpu.core_type<tc>, window_params = [{transform_indices = @transform_0, window_bounds = array<i64: 8, 128>}, {transform_indices = @transform_1, window_bounds = array<i64: 8, 128>}, {transform_indices = @transform_2, window_bounds = array<i64: 4, 8, 128>}]} {
    %c0_i32 = arith.constant 0 : i32
    %0 = arith.cmpi eq, %arg1, %c0_i32 : i32
    %1 = arith.extui %0 : i1 to i32
    %c0_i32_0 = arith.constant 0 : i32
    %2 = arith.cmpi ne, %1, %c0_i32_0 : i32
    scf.if %2 {
      %cst_33 = arith.constant 0.000000e+00 : f32
      %59 = vector.broadcast %cst_33 : f32 to vector<4x8x128xf32>
      %c0_34 = arith.constant 0 : index
      %c0_35 = arith.constant 0 : index
      %c0_36 = arith.constant 0 : index
      %60 = vector.load %arg4[%c0_34, %c0_35, %c0_36] : memref<4x8x128xf32, #tpu.memory_space<vmem>>, vector<4x8x128xf32>
      tpu.vector_store %arg4[%c0_34, %c0_35, %c0_36], %59 {strides = array<i32>} : memref<4x8x128xf32, #tpu.memory_space<vmem>>, vector<4x8x128xf32>,
    } else {
    }
    %cst = arith.constant 0.000000e+00 : f32
    %3 = vector.broadcast %cst : f32 to vector<8x128xf32>
    %cst_1 = arith.constant 0.000000e+00 : f32
    %4 = vector.broadcast %cst_1 : f32 to vector<8x128xf32>
    %cst_2 = arith.constant 0.000000e+00 : f32
    %5 = vector.broadcast %cst_2 : f32 to vector<8x128xf32>
    %cst_3 = arith.constant 0.000000e+00 : f32
    %6 = vector.broadcast %cst_3 : f32 to vector<8x128xf32>
    %c0 = arith.constant 0 : index
    %c0_4 = arith.constant 0 : index
    %7 = vector.load %arg2[%c0, %c0_4] : memref<8x128xf32, #tpu.memory_space<vmem>>, vector<8x128xf32>
    %c0_5 = arith.constant 0 : index
    %c0_6 = arith.constant 0 : index
    %8 = vector.load %arg3[%c0_5, %c0_6] : memref<8x128xf32, #tpu.memory_space<vmem>>, vector<8x128xf32>
    %9 = math.absf %7 : vector<8x128xf32>
    %cst_7 = arith.constant 0.000000e+00 : f32
    %10 = vector.broadcast %cst_7 : f32 to vector<8x128xf32>
    %11 = arith.subf %10, %9 : vector<8x128xf32>
    %12 = math.exp %11 : vector<8x128xf32>
    %cst_8 = arith.constant 1.000000e+00 : f32
    %13 = vector.broadcast %cst_8 : f32 to vector<8x128xf32>
    %14 = arith.addf %13, %12 : vector<8x128xf32>
    %15 = tpu.reciprocal %14 {approx = true} : vector<8x128xf32> -> vector<8x128xf32>
    %16 = arith.mulf %14, %15 : vector<8x128xf32>
    %cst_9 = arith.constant 2.000000e+00 : f32
    %17 = vector.broadcast %cst_9 : f32 to vector<8x128xf32>
    %18 = arith.subf %17, %16 : vector<8x128xf32>
    %19 = arith.mulf %15, %18 : vector<8x128xf32>
    %cst_10 = arith.constant 0.000000e+00 : f32
    %20 = vector.broadcast %cst_10 : f32 to vector<8x128xf32>
    %21 = arith.cmpf oge, %7, %20 : vector<8x128xf32>
    %22 = arith.mulf %12, %19 : vector<8x128xf32>
    %23 = arith.select %21, %19, %22 : vector<8x128xi1>, vector<8x128xf32>
    %cst_11 = arith.constant 0.000000e+00 : f32
    %24 = vector.broadcast %cst_11 : f32 to vector<8x128xf32>
    %25 = arith.maximumf %7, %24 : vector<8x128xf32>
    %26 = arith.mulf %7, %8 : vector<8x128xf32>
    %27 = arith.subf %25, %26 : vector<8x128xf32>
    %28 = math.log %14 : vector<8x128xf32>
    %29 = arith.addf %27, %28 : vector<8x128xf32>
    %30 = arith.addf %3, %29 : vector<8x128xf32>
    %31 = arith.mulf %23, %8 : vector<8x128xf32>
    %32 = arith.addf %4, %31 : vector<8x128xf32>
    %33 = arith.addf %5, %23 : vector<8x128xf32>
    %34 = arith.addf %6, %8 : vector<8x128xf32>
    %c0_12 = arith.constant 0 : index
    %c0_13 = arith.constant 0 : index
    %c0_14 = arith.constant 0 : index
    %35 = vector.load %arg4[%c0_12, %c0_13, %c0_14] : memref<4x8x128xf32, #tpu.memory_space<vmem>>, vector<1x8x128xf32>
    %36 = vector.shape_cast %35 : vector<1x8x128xf32> to vector<8x128xf32>
    %37 = arith.addf %36, %30 : vector<8x128xf32>
    %c0_15 = arith.constant 0 : index
    %c0_16 = arith.constant 0 : index
    %c0_17 = arith.constant 0 : index
    %38 = vector.load %arg4[%c0_15, %c0_16, %c0_17] : memref<4x8x128xf32, #tpu.memory_space<vmem>>, vector<1x8x128xf32>
    %39 = vector.shape_cast %38 : vector<1x8x128xf32> to vector<8x128xf32>
    %40 = vector.shape_cast %37 : vector<8x128xf32> to vector<1x8x128xf32>
    tpu.vector_store %arg4[%c0_15, %c0_16, %c0_17], %40 {strides = array<i32>} : memref<4x8x128xf32, #tpu.memory_space<vmem>>, vector<1x8x128xf32>,
    %c1 = arith.constant 1 : index
    %c0_18 = arith.constant 0 : index
    %c0_19 = arith.constant 0 : index
    %41 = vector.load %arg4[%c1, %c0_18, %c0_19] : memref<4x8x128xf32, #tpu.memory_space<vmem>>, vector<1x8x128xf32>
    %42 = vector.shape_cast %41 : vector<1x8x128xf32> to vector<8x128xf32>
    %43 = arith.addf %42, %32 : vector<8x128xf32>
    %c1_20 = arith.constant 1 : index
    %c0_21 = arith.constant 0 : index
    %c0_22 = arith.constant 0 : index
    %44 = vector.load %arg4[%c1_20, %c0_21, %c0_22] : memref<4x8x128xf32, #tpu.memory_space<vmem>>, vector<1x8x128xf32>
    %45 = vector.shape_cast %44 : vector<1x8x128xf32> to vector<8x128xf32>
    %46 = vector.shape_cast %43 : vector<8x128xf32> to vector<1x8x128xf32>
    tpu.vector_store %arg4[%c1_20, %c0_21, %c0_22], %46 {strides = array<i32>} : memref<4x8x128xf32, #tpu.memory_space<vmem>>, vector<1x8x128xf32>,
    %c2 = arith.constant 2 : index
    %c0_23 = arith.constant 0 : index
    %c0_24 = arith.constant 0 : index
    %47 = vector.load %arg4[%c2, %c0_23, %c0_24] : memref<4x8x128xf32, #tpu.memory_space<vmem>>, vector<1x8x128xf32>
    %48 = vector.shape_cast %47 : vector<1x8x128xf32> to vector<8x128xf32>
    %49 = arith.addf %48, %33 : vector<8x128xf32>
    %c2_25 = arith.constant 2 : index
    %c0_26 = arith.constant 0 : index
    %c0_27 = arith.constant 0 : index
    %50 = vector.load %arg4[%c2_25, %c0_26, %c0_27] : memref<4x8x128xf32, #tpu.memory_space<vmem>>, vector<1x8x128xf32>
    %51 = vector.shape_cast %50 : vector<1x8x128xf32> to vector<8x128xf32>
    %52 = vector.shape_cast %49 : vector<8x128xf32> to vector<1x8x128xf32>
    tpu.vector_store %arg4[%c2_25, %c0_26, %c0_27], %52 {strides = array<i32>} : memref<4x8x128xf32, #tpu.memory_space<vmem>>, vector<1x8x128xf32>,
    %c3 = arith.constant 3 : index
    %c0_28 = arith.constant 0 : index
    %c0_29 = arith.constant 0 : index
    %53 = vector.load %arg4[%c3, %c0_28, %c0_29] : memref<4x8x128xf32, #tpu.memory_space<vmem>>, vector<1x8x128xf32>
    %54 = vector.shape_cast %53 : vector<1x8x128xf32> to vector<8x128xf32>
    %55 = arith.addf %54, %34 : vector<8x128xf32>
    %c3_30 = arith.constant 3 : index
    %c0_31 = arith.constant 0 : index
    %c0_32 = arith.constant 0 : index
    %56 = vector.load %arg4[%c3_30, %c0_31, %c0_32] : memref<4x8x128xf32, #tpu.memory_space<vmem>>, vector<1x8x128xf32>
    %57 = vector.shape_cast %56 : vector<1x8x128xf32> to vector<8x128xf32>
    %58 = vector.shape_cast %55 : vector<8x128xf32> to vector<1x8x128xf32>
    tpu.vector_store %arg4[%c3_30, %c0_31, %c0_32], %58 {strides = array<i32>} : memref<4x8x128xf32, #tpu.memory_space<vmem>>, vector<1x8x128xf32>,
    return
  }
  func.func @transform_0(%arg0: i32, %arg1: i32) -> (i32, i32) {
    %c0_i32 = arith.constant 0 : i32
    return %arg0, %arg1 : i32, i32
  }
  func.func @transform_1(%arg0: i32, %arg1: i32) -> (i32, i32) {
    %c0_i32 = arith.constant 0 : i32
    return %arg0, %arg1 : i32, i32
  }
  func.func @transform_2(%arg0: i32, %arg1: i32) -> (i32, i32, i32) {
    %c0_i32 = arith.constant 0 : i32
    %c0_i32_0 = arith.constant 0 : i32
    %c0_i32_1 = arith.constant 0 : i32
    return %c0_i32, %arg0, %c0_i32_0 : i32, i32, i32
  }
}

</mosaic_0001>

<llo_original>
// kernel: tpu_custom_call.1
$region0: #{tpu_custom_call.1}
  #allocation0 [shape = 'u32[]', space=smem, size = 0x4, offset = 0x4, fixed_abs, tag = 'smem constant byte address 0x4 - core index']
  #allocation1 [shape = 'u32[144,128]{1,0:T(1,128)}', space=vmem, size = 0x12000, scoped, tag = 'internal scratch']
  %s0 = inlined_call_operand.hbm [shape: f32[16,128], index: 0, kind: input, shape index: {}]
  %s1 = inlined_call_operand.hbm [shape: f32[16,128], index: 1, kind: input, shape index: {}]
  %s2 = inlined_call_operand.hbm [shape: f32[4,16,128], index: 2, kind: output, shape index: {}]
  %s3 = sld [smem:[#allocation0]]
  $region53: #{tpu_custom_call.1} parent=0
    _
  %s5 = ssub.s32 1, %s3
  %s6 = scalar_select 0, %s5, %s3
  $region1: #{tpu_custom_call.1} parent=0
    #allocation2 [shape = 'u8[8192]{0}', space=vmem, size = 0x2000, scoped, tag = 'input window, operand 0']
    #allocation3 [shape = 's32[2]{0}', space=sflag, size = 0x8, scoped, tag = 'scoped memory for tpu_custom_call.1']
    #allocation4 [shape = 's32[2]{0}', space=sflag, size = 0x8, scoped, tag = 'scoped memory for tpu_custom_call.1']
    #allocation5 [shape = 'u8[8192]{0}', space=vmem, size = 0x2000, scoped, tag = 'input window, operand 1']
    #allocation6 [shape = 's32[2]{0}', space=sflag, size = 0x8, scoped, tag = 'scoped memory for tpu_custom_call.1']
    #allocation7 [shape = 'u8[32768]{0}', space=vmem, size = 0x8000, scoped, tag = 'output window, operand 0']
    %7 = vsyncpa [#allocation3], 0
    %s8 = scalar_lea.sflag [#allocation3], 1
    %9 = vsyncpa %s8, 0
    %10 = vsyncpa [#allocation6], 0
    %s11 = scalar_lea.sflag [#allocation6], 1
    %12 = vsyncpa %s11, 0
    %13 = vsyncpa [#allocation4], 0
    %s14 = scalar_lea.sflag [#allocation4], 1
    %15 = vsyncpa %s14, 0
    loop: start=0, step=1, limit=4
    $region2: #{tpu_custom_call.1} parent=1 // loop_pre_header
      _
    $region3: #{tpu_custom_call.1} parent=1 // loop_header
      %s17 = sphi 0, %s21
      %p18 = scmp.ge.s32.totalorder %s17, 4
      %s24 = sphi 0, %s36
      %s25 = sphi 0, %s32
      %s26 = sphi 0, %s24
      %s27 = sphi 0, %s25
      %s28 = sphi 0, %s26
      %s29 = sphi 0, %s27
      %s41 = sphi 0, %s43
      %s44 = sphi 0, %s41
      %s45 = sphi 0, %s44
      %s61 = sphi 0, %s45
      %s69 = sphi 0, %s71
      %s72 = sphi 0, %s69
      %s73 = sphi 0, %s72
      %s89 = sphi 0, %s73
      %s95 = sphi 0, %s97
      %s98 = sphi 0, %s95
      %s99 = sphi 0, %s98
      %s115 = sphi 0, %s99
    $region4: #{tpu_custom_call.1} parent=1 // loop_header_branch
      %20 = sbr.rel (%p18) target = $region8
    $region5: #{tpu_custom_call.1} parent=1 // loop_body
      %s22 = ssub.s32 %s17, 1
      %s23 = ssub.s32 %s17, 2
      %s30 = sadd.s32 1, %s25
      %p31 = scmp.ge.s32.totalorder %s30, 1
      %s32 = scalar_select %p31, 0, %s30
      %s33 = sadd.s32 1, %s24
      %s34 = scalar_select %p31, %s33, %s24
      %p35 = scmp.ge.s32.totalorder %s34, 2
      %s36 = scalar_select %p35, 0, %s34
      %s37 = ssub.s32 %s24, %s36
      %s38 = ssub.s32 %s25, %s32
      %s39 = sor.u32 %s37, %s38
      %p40 = scmp.eq.s32.totalorder %s39, 0
      %s42 = sadd.s32 %s41, 1
      %s43 = scalar_select %p40, %s41, %s42
      %p46 = pneg %p40
      %p47 = scmp.eq.s32.totalorder %s17, 1
      %p48 = por %p46, %p47
      %p49 = scmp.ne.s32.totalorder %s41, %s44
      %p50 = scmp.eq.s32.totalorder %s17, 0
      %p51 = por %p49, %p50
      %p52 = scmp.ne.s32.totalorder %s41, %s44
      %p53 = scmp.eq.s32.totalorder %s22, 1
      %p54 = por %p52, %p53
      %p55 = scmp.ne.s32.totalorder %s44, %s45
      %p56 = scmp.eq.s32.totalorder %s22, 0
      %p57 = por %p55, %p56
      %p58 = scmp.ne.s32.totalorder %s44, %s45
      %p59 = scmp.eq.s32.totalorder %s23, 1
      %p60 = por %p58, %p59
      %p62 = scmp.ne.s32.totalorder %s45, %s61
      %p63 = scmp.eq.s32.totalorder %s23, 0
      %p64 = por %p62, %p63
      %s65 = ssub.s32 %s24, %s36
      %s66 = ssub.s32 %s25, %s32
      %s67 = sor.u32 %s65, %s66
      %p68 = scmp.eq.s32.totalorder %s67, 0
      %s70 = sadd.s32 %s69, 1
      %s71 = scalar_select %p68, %s69, %s70
      %p74 = pneg %p68
      %p75 = scmp.eq.s32.totalorder %s17, 1
      %p76 = por %p74, %p75
      %p77 = scmp.ne.s32.totalorder %s69, %s72
      %p78 = scmp.eq.s32.totalorder %s17, 0
      %p79 = por %p77, %p78
      %p80 = scmp.ne.s32.totalorder %s69, %s72
      %p81 = scmp.eq.s32.totalorder %s22, 1
      %p82 = por %p80, %p81
      %p83 = scmp.ne.s32.totalorder %s72, %s73
      %p84 = scmp.eq.s32.totalorder %s22, 0
      %p85 = por %p83, %p84
      %p86 = scmp.ne.s32.totalorder %s72, %s73
      %p87 = scmp.eq.s32.totalorder %s23, 1
      %p88 = por %p86, %p87
      %p90 = scmp.ne.s32.totalorder %s73, %s89
      %p91 = scmp.eq.s32.totalorder %s23, 0
      %p92 = por %p90, %p91
      %s93 = ssub.s32 %s24, %s36
      %p94 = scmp.eq.s32.totalorder %s93, 0
      %s96 = sadd.s32 %s95, 1
      %s97 = scalar_select %p94, %s95, %s96
      %p100 = pneg %p94
      %p101 = scmp.eq.s32.totalorder %s17, 1
      %p102 = por %p100, %p101
      %p103 = scmp.ne.s32.totalorder %s95, %s98
      %p104 = scmp.eq.s32.totalorder %s17, 0
      %p105 = por %p103, %p104
      %p106 = scmp.ne.s32.totalorder %s95, %s98
      %p107 = scmp.eq.s32.totalorder %s22, 1
      %p108 = por %p106, %p107
      %p109 = scmp.ne.s32.totalorder %s98, %s99
      %p110 = scmp.eq.s32.totalorder %s22, 0
      %p111 = por %p109, %p110
      %p112 = scmp.ne.s32.totalorder %s98, %s99
      %p113 = scmp.eq.s32.totalorder %s23, 1
      %p114 = por %p112, %p113
      %p116 = scmp.ne.s32.totalorder %s99, %s115
      %p117 = scmp.eq.s32.totalorder %s23, 0
      %p118 = por %p116, %p117
      %p119 = scmp.le.s32.totalorder 1, %s17
      %p120 = scmp.lt.s32.totalorder %s17, 3
      %p121 = pnand %p119, %p120
      %p122 = pneg %p121
      // Predicated region
      $region9: #{tpu_custom_call.1} parent=5 // pred_check
        _
      $region10: #{tpu_custom_call.1} parent=5 // pred_check_branch
        %124 = sbr.rel (%p121) target = $region12
      $region11: #{tpu_custom_call.1} parent=5 // pred_region
        %s125 = ssub.s32 %s17, 1
      $region12: #{tpu_custom_call.1} parent=5 // pred_fallthru
        _
      %p126 = scmp.lt.s32.totalorder %s17, 2
      // Predicated region
      $region13: #{tpu_custom_call.1} parent=5 // pred_check
        %p127 = pneg %p126
      $region14: #{tpu_custom_call.1} parent=5 // pred_check_branch
        %129 = sbr.rel (%p127) target = $region16
      $region15: #{tpu_custom_call.1} parent=5 // pred_region
        // Predicated region
        $region17: #{tpu_custom_call.1} parent=15 // pred_check
          %p130 = pneg %p51
        $region18: #{tpu_custom_call.1} parent=15 // pred_check_branch
          %132 = sbr.rel (%p130) target = $region20
        $region19: #{tpu_custom_call.1} parent=15 // pred_region
          %s133 = sand.u32 %s41, 1
          %s134 = scalar_lea.sflag [#allocation3], %s133
          %s135 = sand.u32 %s41, 1
          %s136 = smul.addr %s135, 8
          %s137 = scalar_lea.vmem [#allocation2], %s136
          %s139 = ssub.s32 128, 128
          %140 = vsyncadd %s134, %s139
          %s141 = sadd.s32 %s25, %s24
          %s142 = smul.addr %s141, 128
          %s143 = scalar_lea.hbm %s0, %s142
          %s145 = sshll.u32 %s137, 4
          %s146 = int_to_ptr.vmem [resolvable:$true] %s145
          %148 = dma.hbm_to_vmem [thread:$0]  %s143, 128, %s146, %s134
        $region20: #{tpu_custom_call.1} parent=15 // pred_fallthru
          _
        // Predicated region
        $region21: #{tpu_custom_call.1} parent=15 // pred_check
          %p149 = pneg %p79
        $region22: #{tpu_custom_call.1} parent=15 // pred_check_branch
          %151 = sbr.rel (%p149) target = $region24
        $region23: #{tpu_custom_call.1} parent=15 // pred_region
          %s152 = sand.u32 %s69, 1
          %s153 = scalar_lea.sflag [#allocation6], %s152
          %s154 = sand.u32 %s69, 1
          %s155 = smul.addr %s154, 8
          %s156 = scalar_lea.vmem [#allocation5], %s155
          %s158 = ssub.s32 128, 128
          %159 = vsyncadd %s153, %s158
          %s160 = sadd.s32 %s25, %s24
          %s161 = smul.addr %s160, 128
          %s162 = scalar_lea.hbm %s1, %s161
          %s164 = sshll.u32 %s156, 4
          %s165 = int_to_ptr.vmem [resolvable:$true] %s164
          %167 = dma.hbm_to_vmem [thread:$0]  %s162, 128, %s165, %s153
        $region24: #{tpu_custom_call.1} parent=15 // pred_fallthru
          _
      $region16: #{tpu_custom_call.1} parent=5 // pred_fallthru
        _
      %p168 = scmp.le.s32.totalorder 1, %s17
      %p169 = scmp.lt.s32.totalorder %s17, 3
      %p170 = pnand %p168, %p169
      %p171 = pneg %p170
      // Predicated region
      $region25: #{tpu_custom_call.1} parent=5 // pred_check
        _
      $region26: #{tpu_custom_call.1} parent=5 // pred_check_branch
        %173 = sbr.rel (%p170) target = $region28
      $region27: #{tpu_custom_call.1} parent=5 // pred_region
        %s174 = ssub.s32 %s17, 1
        %s175 = sand.u32 %s44, 1
        %s176 = scalar_lea.sflag [#allocation3], %s175
        %s177 = sand.u32 %s44, 1
        %s178 = smul.addr %s177, 8
        %s179 = scalar_lea.vmem [#allocation2], %s178
        // Predicated region
        $region29: #{tpu_custom_call.1} parent=27 // pred_check
          %p180 = pneg %p57
        $region30: #{tpu_custom_call.1} parent=27 // pred_check_branch
          %182 = sbr.rel (%p180) target = $region32
        $region31: #{tpu_custom_call.1} parent=27 // pred_region
          %183 = dma.done %s176, 128
        $region32: #{tpu_custom_call.1} parent=27 // pred_fallthru
          _
        %s184 = sand.u32 %s72, 1
        %s185 = scalar_lea.sflag [#allocation6], %s184
        %s186 = sand.u32 %s72, 1
        %s187 = smul.addr %s186, 8
        %s188 = scalar_lea.vmem [#allocation5], %s187
        // Predicated region
        $region33: #{tpu_custom_call.1} parent=27 // pred_check
          %p189 = pneg %p85
        $region34: #{tpu_custom_call.1} parent=27 // pred_check_branch
          %191 = sbr.rel (%p189) target = $region36
        $region35: #{tpu_custom_call.1} parent=27 // pred_region
          %192 = dma.done %s185, 128
        $region36: #{tpu_custom_call.1} parent=27 // pred_fallthru
          _
        %s193 = sand.u32 %s44, 1
        %s194 = scalar_lea.sflag [#allocation3], %s193
        %s195 = sand.u32 %s44, 1
        %s196 = smul.addr %s195, 8
        %s197 = scalar_lea.vmem [#allocation2], %s196
        %p198 = pneg %p57
        %p199 = pneg %p54
        %s200 = sand.u32 %s72, 1
        %s201 = scalar_lea.sflag [#allocation6], %s200
        %s202 = sand.u32 %s72, 1
        %s203 = smul.addr %s202, 8
        %s204 = scalar_lea.vmem [#allocation5], %s203
        %p205 = pneg %p85
        %p206 = pneg %p82
        %p207 = pneg %p111
        %p208 = pneg %p108
        %s209 = sand.u32 %s98, 1
        %s210 = scalar_lea.sflag [#allocation4], %s209
        %s211 = sand.u32 %s98, 1
        %s212 = smul.addr %s211, 32
        %s213 = scalar_lea.vmem [#allocation7], %s212
        %p214 = scmp.eq.s32.totalorder %s27, 0
        // Predicated region
        $region37: #{tpu_custom_call.1} parent=27 // pred_check
          %p215 = pneg %p214
        $region38: #{tpu_custom_call.1} parent=27 // pred_check_branch
          %217 = sbr.rel (%p215) target = $region40
        $region39: #{tpu_custom_call.1} parent=27 // pred_region
          %218 = vst [vmem:[%s213] sm:$0xff] 0.0
          %219 = vst [vmem:[%s213 + $0x8] sm:$0xff] 0.0
          %220 = vst [vmem:[%s213 + $0x10] sm:$0xff] 0.0
          %221 = vst [vmem:[%s213 + $0x18] sm:$0xff] 0.0
        $region40: #{tpu_custom_call.1} parent=27 // pred_fallthru
          _
        %v222 = vld [vmem:[%s179] sm:$0xff]
        %v223 = vld [vmem:[%s188] sm:$0xff]
        %v224 = vand.u32 2147483647, %v222
        %v225 = vsub.f32 0.0, %v224
        %v226 = vmul.f32 %v225, 1.442695
        %v227 = vpow.pop %v226
        %v228 = vadd.f32 %v227, 1.0
        %v229 = vrcp.pop %v228
        %v230 = vmul.f32 %v228, %v229
        %v231 = vsub.f32 2.0, %v230
        %v232 = vmul.f32 %v229, %v231
        %vm233 = vcmp.ge.f32.partialorder %v222, 0.0
        %v234 = vmul.f32 %v227, %v232
        %v235 = vsel %vm233, %v232, %v234
        %v236 = vmax.f32 %v222, 0.0
        %v237 = vmul.f32 %v222, %v223
        %v238 = vsub.f32 %v236, %v237
        %v239 = vlog2.pop %v228
        %v240 = vmul.f32 %v239, 0.6931472
        %v241 = vadd.f32 %v238, %v240
        %v242 = vadd.f32 %v241, 0.0
        %v243 = vmul.f32 %v235, %v223
        %v244 = vadd.f32 %v243, 0.0
        %v245 = vadd.f32 %v235, 0.0
        %v246 = vadd.f32 %v223, 0.0
        %v247 = vld [vmem:[%s213] sm:$0xff]
        %v248 = vadd.f32 %v247, %v242
        %249 = vst [vmem:[%s213] sm:$0xff] %v248
        %s250 = scalar_lea.vmem %s213, 8 [#allocation7]
        %v251 = vld [vmem:[%s250] sm:$0xff]
        %v252 = vadd.f32 %v251, %v244
        %253 = vst [vmem:[%s250] sm:$0xff] %v252
        %s254 = scalar_lea.vmem %s213, 16 [#allocation7]
        %v255 = vld [vmem:[%s254] sm:$0xff]
        %v256 = vadd.f32 %v255, %v245
        %257 = vst [vmem:[%s254] sm:$0xff] %v256
        %s258 = scalar_lea.vmem %s213, 24 [#allocation7]
        %v259 = vld [vmem:[%s258] sm:$0xff]
        %v260 = vadd.f32 %v259, %v246
        %261 = vst [vmem:[%s258] sm:$0xff] %v260
        %s262 = sand.u32 %s98, 1
        %s263 = scalar_lea.sflag [#allocation4], %s262
        %s264 = sand.u32 %s98, 1
        %s265 = smul.addr %s264, 32
        %s266 = scalar_lea.vmem [#allocation7], %s265
        // Predicated region
        $region41: #{tpu_custom_call.1} parent=27 // pred_check
          %p267 = pneg %p108
        $region42: #{tpu_custom_call.1} parent=27 // pred_check_branch
          %269 = sbr.rel (%p267) target = $region44
        $region43: #{tpu_custom_call.1} parent=27 // pred_region
          %s271 = ssub.s32 512, 512
          %272 = vsyncadd %s263, %s271
          %s273 = smul.addr %s26, 128
          %s274 = scalar_lea.hbm %s2, %s273
          %s275 = sshll.u32 %s266, 4
          %s276 = int_to_ptr.vmem [resolvable:$true] %s275
          %281 = dma.vmem_to_hbm [thread:$0]  %s276, 512, %s274, %s263, 128, 256, 8
        $region44: #{tpu_custom_call.1} parent=27 // pred_fallthru
          _
      $region28: #{tpu_custom_call.1} parent=5 // pred_fallthru
        _
      %p282 = scmp.le.s32.totalorder 2, %s17
      // Predicated region
      $region45: #{tpu_custom_call.1} parent=5 // pred_check
        %p283 = pneg %p282
      $region46: #{tpu_custom_call.1} parent=5 // pred_check_branch
        %285 = sbr.rel (%p283) target = $region48
      $region47: #{tpu_custom_call.1} parent=5 // pred_region
        %s286 = ssub.s32 %s17, 2
        // Predicated region
        $region49: #{tpu_custom_call.1} parent=47 // pred_check
          %p287 = pneg %p114
        $region50: #{tpu_custom_call.1} parent=47 // pred_check_branch
          %289 = sbr.rel (%p287) target = $region52
        $region51: #{tpu_custom_call.1} parent=47 // pred_region
          %s290 = sand.u32 %s99, 1
          %s291 = scalar_lea.sflag [#allocation4], %s290
          %s292 = sand.u32 %s99, 1
          %s293 = smul.addr %s292, 32
          %s294 = scalar_lea.vmem [#allocation7], %s293
          %295 = dma.done %s291, 512
        $region52: #{tpu_custom_call.1} parent=47 // pred_fallthru
          _
      $region48: #{tpu_custom_call.1} parent=5 // pred_fallthru
        _
    $region6: #{tpu_custom_call.1} parent=1 // loop_footer
      %s21 = sadd.s32 1, %s17
    $region7: #{tpu_custom_call.1} parent=1 // loop_footer_branch
      %16 = sbr.rel target = $region3
    $region8: #{tpu_custom_call.1} parent=1 // loop_exit
      _
    %296 = vsyncpa [#allocation3], 1
    %s297 = scalar_lea.sflag [#allocation3], 1
    %298 = vsyncpa %s297, 1
    %299 = vsyncpa [#allocation6], 1
    %s300 = scalar_lea.sflag [#allocation6], 1
    %301 = vsyncpa %s300, 1
    %302 = vsyncpa [#allocation4], 1
    %s303 = scalar_lea.sflag [#allocation4], 1
    %304 = vsyncpa %s303, 1

</llo_original>
